<compile_context>
chip_gen: v7x
topology: tpu7x:2x2x1
jax: 0.10.0
libtpu: 0.0.40
codegen_flags: <defaults>
</compile_context>

<pallas_src>
from functools import partial

import numpy as np
import jax
import jax.numpy as jnp
from jax.experimental import pallas as pl
from jax.experimental.pallas import tpu as pltpu

EMB = 32            # embedding_dim
MAX_TILE = 8192     # pixels (lanes) per grid step
GELU_APPROX = True  # tanh-approx GELU (torch.nn.GELU default is exact erf)


# ------------------------------- Pallas kernel ------------------------------ #
def prenet_kernel(ks_ref, aux_ref, wks_ref, waux_ref,
                  w1b_ref, w2a_ref, w2b_ref, sh_ref, out_ref):
    gelu = partial(jax.nn.gelu, approximate=GELU_APPROX)
    f32, bf16 = jnp.float32, jnp.bfloat16

    ks = ks_ref[0]          # (2, T)   kspace channels, pixels on lanes
    aux = aux_ref[...]      # (7, T)   [ky, kx, sin/cos(2*pi*ky), sin/cos(2*pi*kx), mask_id]
    sh = sh_ref[...]        # (EMB, 4) packed BN shifts [t1a', t1b, t2a, t2b]

    # Fused first layer (pos_proj + mask-emb + channel concat + BN scale folded
    # into the weights) as two tiny-K MXU matmuls — the MXU has large slack here.
    pre = (jnp.dot(wks_ref[...], ks, preferred_element_type=f32)
           + jnp.dot(waux_ref[...], aux, preferred_element_type=f32))
    h = gelu(pre + sh[:, 0:1])                                        # (EMB, T) f32

    # Remaining 1x1 convs: (EMB,EMB)@(EMB,T) on the MXU, bf16 in / f32 accum.
    z = jnp.dot(w1b_ref[...], h.astype(bf16), preferred_element_type=f32)
    h = gelu(z + sh[:, 1:2])                                          # mixer-1 output

    y = jnp.dot(w2a_ref[...], h.astype(bf16), preferred_element_type=f32)
    y = gelu(y + sh[:, 2:3])
    y = jnp.dot(w2b_ref[...], y.astype(bf16), preferred_element_type=f32)
    y = gelu(y + sh[:, 3:4])

    out_ref[0] = (h + y).astype(out_ref.dtype)                        # mixer-2 residual


def prenet_pallas(ks, aux, kp):
    """ks: (n, 2, HM) f32;  aux: (7, HM) f32  ->  (n, EMB, HM) f32."""
    n, _, HM = ks.shape
    T = min(MAX_TILE, pl.cdiv(HM, 128) * 128)      # lane-dense tile, no host padding
    tiles = pl.cdiv(HM, T)

    w_names = ("wks", "waux", "w1b", "w2a", "w2b", "shifts")
    weights = [kp[k] for k in w_names]
    full = lambda a: pl.BlockSpec(a.shape, lambda t, s: (0,) * a.ndim)  # VMEM-resident

    return pl.pallas_call(
        prenet_kernel,
        out_shape=jax.ShapeDtypeStruct((n, EMB, HM), jnp.float32),
        # Slice axis innermost -> shared aux block index (0, t) is constant across
        # consecutive steps (no re-DMA); tiles leading -> even megacore split (v7x).
        grid=(tiles, n),
        in_specs=[pl.BlockSpec((1, 2, T), lambda t, s: (s, 0, t)),
                  pl.BlockSpec((7, T), lambda t, s: (0, t))]
                 + [full(w) for w in weights],
        out_specs=pl.BlockSpec((1, EMB, T), lambda t, s: (s, 0, t)),
        compiler_params=pltpu.CompilerParams(
            dimension_semantics=("parallel", "parallel")),
    )(ks, aux, *weights)


# --------------------------- weight fusion (host) --------------------------- #
def prepare_kernel_params(params):
    """Fold pos_proj bias, mask embedding, the channel concat AND the BN scales
    into the conv weights.  NOTE: the mask-embedding fold (delta = emb[1]-emb[0])
    is only valid for a binary {0,1} mask-id table."""
    f32, bf16 = jnp.float32, jnp.bfloat16
    w1a_pe = params["w1a_pe"]                                          # (EMB, EMB)
    wf_pos = w1a_pe @ params["pos_w"]                                  # (EMB, 6)
    d = w1a_pe @ (params["mask_emb"][1] - params["mask_emb"][0])       # (EMB,)  id-delta
    c0 = w1a_pe @ (params["pos_b"] + params["mask_emb"][0])            # (EMB,)  constant

    s1a = params["s1a"]                                                # (EMB, 1)
    wks = (s1a * params["w1a_ks"]).astype(f32)                         # (EMB, 2)
    waux = (s1a * jnp.concatenate([wf_pos, d[:, None]], axis=1)).astype(f32)  # (EMB, 7)
    t1a = params["t1a"] + s1a * c0[:, None]                            # (EMB, 1)

    shifts = jnp.concatenate(
        [t1a, params["t1b"], params["t2a"], params["t2b"]], axis=1).astype(f32)  # (EMB, 4)
    return {
        "wks": wks,
        "waux": waux,
        "w1b": (params["s1b"] * params["w1b"]).astype(bf16),
        "w2a": (params["s2a"] * params["w2a"]).astype(bf16),
        "w2b": (params["s2b"] * params["w2b"]).astype(bf16),
        "shifts": shifts,
    }


# -------------------------------- glue (JAX) -------------------------------- #
_AUX_CACHE = {}


def _build_aux(H, W, cols, ids):
    """Per-pixel positional/mask features shared across slices: (7, H*M).  Cached."""
    # TODO(synk): KspacePositionEmbedding source was not provided; using the same
    # deterministic 6-channel coordinate/frequency embedding as previous versions.
    key = (H, W, cols.tobytes(), ids.tobytes())
    hit = _AUX_CACHE.get(key)
    if hit is not None:
        return hit
    M = int(cols.shape[0])
    ky = (np.arange(H, dtype=np.float32) - H / 2.0) / H
    kx = (cols.astype(np.float32) - W / 2.0) / W
    tp = np.float32(2.0 * np.pi)
    aux = np.empty((7, H, M), np.float32)
    aux[0] = ky[:, None]
    aux[1] = kx[None, :]
    aux[2] = np.sin(tp * ky)[:, None]
    aux[3] = np.cos(tp * ky)[:, None]
    aux[4] = np.sin(tp * kx)[None, :]
    aux[5] = np.cos(tp * kx)[None, :]
    aux[6] = ids.astype(np.float32)[None, :]
    aux = jnp.asarray(aux.reshape(7, H * M))
    _AUX_CACHE[key] = aux
    return aux


def _select_cols(masked_kspace, cols, W):
    """Column gather; strided slice when the sampled columns form an arithmetic progression."""
    M = int(cols.shape[0])
    if M == W:
        return masked_kspace
    if M > 1:
        d = np.diff(cols)
        if np.all(d == d[0]) and d[0] > 0:
            return masked_kspace[:, :, :, int(cols[0]):int(cols[-1]) + 1:int(d[0])]
    return masked_kspace[:, :, :, cols]


def prenet_forward(masked_kspace, col_mask, params, filter_masked=True):
    """masked_kspace: (n,2,H,W) NCHW; col_mask: (1,1,1,W) 0/1.  Returns (n,EMB,H,M)."""
    n, _, H, W = masked_kspace.shape
    cm = np.asarray(col_mask).reshape(-1)
    cols = np.nonzero(cm.astype(bool))[0] if filter_masked else np.arange(W)
    ids = cm[cols].astype(np.float32)
    M = int(cols.shape[0])

    aux = _build_aux(H, W, cols, ids)                                  # (7, H*M) shared
    # NCHW keeps pixels contiguous in (C, H*M) layout -> no big transposes.
    ks = _select_cols(masked_kspace, cols, W).reshape(n, 2, H * M)     # (n, 2, H*M)

    kp = prepare_kernel_params(params)
    out = prenet_pallas(ks, aux, kp)                                   # (n, EMB, H*M)
    # NOTE: emit bf16 (out_shape dtype + final astype) if downstream accepts it —
    # halves the dominant HBM write stream (matters most on v5e).
    return out.reshape(n, EMB, H, M)                                   # NCHW


# ------------------------- pure-JAX reference (unfused) --------------------- #
def prenet_reference(masked_kspace, col_mask, params, filter_masked=True,
                     approximate=False):
    n, _, H, W = masked_kspace.shape
    cm = np.asarray(col_mask).reshape(-1)
    cols = np.nonzero(cm.astype(bool))[0] if filter_masked else np.arange(W)
    ids = cm[cols].astype(np.int32)
    f32, bf16 = jnp.float32, jnp.bfloat16
    gelu = partial(jax.nn.gelu, approximate=approximate)

    ky = (jnp.arange(H, dtype=f32) - H / 2.0) / H
    kx = (jnp.arange(W, dtype=f32) - W / 2.0) / W
    ky2 = jnp.broadcast_to(ky[:, None], (H, W))
    kx2 = jnp.broadcast_to(kx[None, :], (H, W))
    tp = 2.0 * jnp.pi
    pos6 = jnp.stack([ky2, kx2, jnp.sin(tp * ky2), jnp.cos(tp * ky2),
                      jnp.sin(tp * kx2), jnp.cos(tp * kx2)], axis=-1)   # (H, W, 6)
    pos6 = pos6[:, cols, :]                                             # (H, M, 6)
    pe = jnp.einsum('hmf,of->hmo', pos6, params["pos_w"]) + params["pos_b"]
    pe = pe + params["mask_emb"][ids][None, :, :]
    pe = jnp.broadcast_to(pe[None], (n, H, len(cols), EMB))

    ks = jnp.transpose(masked_kspace[:, :, :, cols], (0, 2, 3, 1))      # (n,H,M,2)
    x = jnp.concatenate([ks, pe], axis=-1)                              # (n,H,M,2+EMB)

    def layer(z, w, s, t, cast):
        if cast:
            zz = jnp.einsum('nhmc,oc->nhmo', z.astype(bf16), w.astype(bf16),
                            preferred_element_type=f32)
        else:
            zz = jnp.einsum('nhmc,oc->nhmo', z, w, preferred_element_type=f32)
        return gelu(zz * s[:, 0] + t[:, 0])

    w1a = jnp.concatenate([params["w1a_ks"], params["w1a_pe"]], axis=1)  # (EMB, 2+EMB)
    h = layer(x, w1a, params["s1a"], params["t1a"], cast=False)
    h = layer(h, params["w1b"], params["s1b"], params["t1b"], cast=True)
    y = layer(h, params["w2a"], params["s2a"], params["t2a"], cast=True)
    y = layer(y, params["w2b"], params["s2b"], params["t2b"], cast=True)
    return jnp.transpose(h + y, (0, 3, 1, 2))                           # (n,EMB,H,M)


# ------------------------------ parameter setup ------------------------------ #
def init_params(key):
    keys = iter(jax.random.split(key, 32))
    nk = lambda: next(keys)
    f32 = jnp.float32
    p = {}
    # weights stored as (out_ch, in_ch), i.e. PyTorch 1x1-conv layout
    p["pos_w"] = (0.2 * jax.random.normal(nk(), (EMB, 6))).astype(f32)
    p["pos_b"] = (0.1 * jax.random.normal(nk(), (EMB,))).astype(f32)
    p["mask_emb"] = (0.5 * jax.random.normal(nk(), (2, EMB))).astype(f32)

    def bn_fold(c):
        # deterministic "running stats" BN folded into scale/shift (inference form)
        gamma = 1.0 + 0.1 * jax.random.normal(nk(), (c,))
        beta = 0.1 * jax.random.normal(nk(), (c,))
        mean = 0.1 * jax.random.normal(nk(), (c,))
        var = 1.0 + 0.1 * jnp.abs(jax.random.normal(nk(), (c,)))
        scale = gamma / jnp.sqrt(var + 1e-5)
        shift = beta - mean * scale
        return scale.reshape(c, 1).astype(f32), shift.reshape(c, 1).astype(f32)

    # Mixer 1 layer a: full conv weight is (EMB, 2+EMB); stored split for the concat fold.
    p["w1a_ks"] = (0.3 * jax.random.normal(nk(), (EMB, 2))).astype(f32)
    p["w1a_pe"] = (0.1 * jax.random.normal(nk(), (EMB, EMB))).astype(f32)
    p["s1a"], p["t1a"] = bn_fold(EMB)
    p["w1b"] = (0.1 * jax.random.normal(nk(), (EMB, EMB))).astype(f32)
    p["s1b"], p["t1b"] = bn_fold(EMB)
    # Mixer 2 (residual)
    p["w2a"] = (0.1 * jax.random.normal(nk(), (EMB, EMB))).astype(f32)
    p["s2a"], p["t2a"] = bn_fold(EMB)
    p["w2b"] = (0.1 * jax.random.normal(nk(), (EMB, EMB))).astype(f32)
    p["s2b"], p["t2b"] = bn_fold(EMB)
    return p


# ----------------------------------- main ------------------------------------ #
if __name__ == "__main__":
    key = jax.random.PRNGKey(0)
    k_param, k_data = jax.random.split(key)
    params = init_params(k_param)

    n_slices, H, W = 2, 16, 16
    masked_kspace = jax.random.normal(k_data, (n_slices, 2, H, W), dtype=jnp.float32)

    # deterministic column sampling mask (every other column sampled)
    col_mask = np.zeros((1, 1, 1, W), dtype=np.float32)
    col_mask[..., ::2] = 1.0
    M = int(col_mask.sum())

    # zero out unsampled kspace columns (as a masked_kspace would be)
    masked_kspace = masked_kspace * jnp.asarray(col_mask)

    out = prenet_forward(masked_kspace, col_mask, params, filter_masked=True)
    out = jax.block_until_ready(out)
    assert out.shape == (n_slices, EMB, H, M), out.shape
    assert bool(jnp.all(jnp.isfinite(out)))

    # 1) correctness vs a pure-JAX reference using the SAME GELU variant
    #    (isolates layout / fusion / bf16-matmul error; tol driven by bf16).
    ref_same = prenet_reference(masked_kspace, col_mask, params,
                                filter_masked=True, approximate=GELU_APPROX)
    np.testing.assert_allclose(np.asarray(out), np.asarray(ref_same),
                               rtol=2e-2, atol=2e-2)

    # 2) drift vs torch's exact-erf GELU semantics (tanh-approx + bf16 matmuls).
    ref_erf = prenet_reference(masked_kspace, col_mask, params,
                               filter_masked=True, approximate=False)
    np.testing.assert_allclose(np.asarray(out), np.asarray(ref_erf),
                               rtol=5e-2, atol=5e-2)

    print("KERNEL_OK")
</pallas_src>

<mosaic_0001>
module attributes {stable_mosaic.version = 11 : i64} {
  func.func @prenet_kernel(%arg0: i32, %arg1: i32, %arg2: memref<1x2x128xf32, #tpu.memory_space<vmem>>, %arg3: memref<7x128xf32, #tpu.memory_space<vmem>>, %arg4: memref<32x2xf32, #tpu.memory_space<vmem>>, %arg5: memref<32x7xf32, #tpu.memory_space<vmem>>, %arg6: memref<32x32xbf16, #tpu.memory_space<vmem>>, %arg7: memref<32x32xbf16, #tpu.memory_space<vmem>>, %arg8: memref<32x32xbf16, #tpu.memory_space<vmem>>, %arg9: memref<32x4xf32, #tpu.memory_space<vmem>>, %arg10: memref<1x32x128xf32, #tpu.memory_space<vmem>>) attributes {dimension_semantics = [#tpu.dimension_semantics<parallel>, #tpu.dimension_semantics<parallel>], iteration_bounds = array<i64: 1, 2>, scalar_prefetch = 0 : i64, scratch_operands = 0 : i64, tpu.core_type = #tpu.core_type<tc>, window_params = [{transform_indices = @transform_0, window_bounds = array<i64: 1, 2, 128>}, {transform_indices = @transform_1, window_bounds = array<i64: 7, 128>}, {pipeline_mode = #tpu.pipeline_mode<synchronous>, transform_indices = @transform_2, window_bounds = array<i64: 32, 2>}, {pipeline_mode = #tpu.pipeline_mode<synchronous>, transform_indices = @transform_3, window_bounds = array<i64: 32, 7>}, {pipeline_mode = #tpu.pipeline_mode<synchronous>, transform_indices = @transform_4, window_bounds = array<i64: 32, 32>}, {pipeline_mode = #tpu.pipeline_mode<synchronous>, transform_indices = @transform_5, window_bounds = array<i64: 32, 32>}, {pipeline_mode = #tpu.pipeline_mode<synchronous>, transform_indices = @transform_6, window_bounds = array<i64: 32, 32>}, {pipeline_mode = #tpu.pipeline_mode<synchronous>, transform_indices = @transform_7, window_bounds = array<i64: 32, 4>}, {transform_indices = @transform_8, window_bounds = array<i64: 1, 32, 128>}]} {
    %c0 = arith.constant 0 : index
    %c0_0 = arith.constant 0 : index
    %c0_1 = arith.constant 0 : index
    %0 = vector.load %arg2[%c0, %c0_0, %c0_1] : memref<1x2x128xf32, #tpu.memory_space<vmem>>, vector<1x2x128xf32>
    %1 = vector.shape_cast %0 : vector<1x2x128xf32> to vector<2x128xf32>
    %c0_2 = arith.constant 0 : index
    %c0_3 = arith.constant 0 : index
    %2 = vector.load %arg3[%c0_2, %c0_3] : memref<7x128xf32, #tpu.memory_space<vmem>>, vector<7x128xf32>
    %c0_4 = arith.constant 0 : index
    %c0_5 = arith.constant 0 : index
    %3 = vector.load %arg9[%c0_4, %c0_5] : memref<32x4xf32, #tpu.memory_space<vmem>>, vector<32x4xf32>
    %c0_6 = arith.constant 0 : index
    %c0_7 = arith.constant 0 : index
    %4 = vector.load %arg4[%c0_6, %c0_7] : memref<32x2xf32, #tpu.memory_space<vmem>>, vector<32x2xf32>
    %cst = arith.constant dense<0.000000e+00> : vector<32x128xf32>
    %5 = tpu.matmul %4, %1, %cst {dimension_numbers = #tpu.dot_dimension_numbers<[1], [0], [0], [1], [0, 0, 1, 1], [], []>} : vector<32x2xf32>, vector<2x128xf32>, vector<32x128xf32> -> vector<32x128xf32>
    %c0_8 = arith.constant 0 : index
    %c0_9 = arith.constant 0 : index
    %6 = vector.load %arg5[%c0_8, %c0_9] : memref<32x7xf32, #tpu.memory_space<vmem>>, vector<32x7xf32>
    %cst_10 = arith.constant dense<0.000000e+00> : vector<32x128xf32>
    %7 = tpu.matmul %6, %2, %cst_10 {dimension_numbers = #tpu.dot_dimension_numbers<[1], [0], [0], [1], [0, 0, 1, 1], [], []>} : vector<32x7xf32>, vector<7x128xf32>, vector<32x128xf32> -> vector<32x128xf32>
    %8 = arith.addf %5, %7 : vector<32x128xf32>
    %9 = vector.extract_strided_slice %3 {offsets = [0, 0], sizes = [32, 1], strides = [1, 1]} : vector<32x4xf32> to vector<32x1xf32>
    %10 = vector.broadcast %9 : vector<32x1xf32> to vector<32x128xf32>
    %11 = arith.addf %8, %10 : vector<32x128xf32>
    %12 = arith.mulf %11, %11 : vector<32x128xf32>
    %13 = arith.mulf %11, %12 : vector<32x128xf32>
    %cst_11 = arith.constant 4.471500e-02 : f32
    %14 = vector.broadcast %cst_11 : f32 to vector<32x128xf32>
    %15 = arith.mulf %14, %13 : vector<32x128xf32>
    %16 = arith.addf %11, %15 : vector<32x128xf32>
    %cst_12 = arith.constant 0.797884583 : f32
    %17 = vector.broadcast %cst_12 : f32 to vector<32x128xf32>
    %18 = arith.mulf %17, %16 : vector<32x128xf32>
    %19 = math.tanh %18 : vector<32x128xf32>
    %cst_13 = arith.constant 1.000000e+00 : f32
    %20 = vector.broadcast %cst_13 : f32 to vector<32x128xf32>
    %21 = arith.addf %20, %19 : vector<32x128xf32>
    %cst_14 = arith.constant 5.000000e-01 : f32
    %22 = vector.broadcast %cst_14 : f32 to vector<32x128xf32>
    %23 = arith.mulf %22, %21 : vector<32x128xf32>
    %24 = arith.mulf %11, %23 : vector<32x128xf32>
    %c0_15 = arith.constant 0 : index
    %c0_16 = arith.constant 0 : index
    %25 = vector.load %arg6[%c0_15, %c0_16] : memref<32x32xbf16, #tpu.memory_space<vmem>>, vector<32x32xbf16>
    %26 = arith.truncf %24 : vector<32x128xf32> to vector<32x128xbf16>
    %cst_17 = arith.constant dense<0.000000e+00> : vector<32x128xf32>
    %27 = tpu.matmul %25, %26, %cst_17 {dimension_numbers = #tpu.dot_dimension_numbers<[1], [0], [0], [1], [0, 0, 1, 1], [], []>} : vector<32x32xbf16>, vector<32x128xbf16>, vector<32x128xf32> -> vector<32x128xf32>
    %28 = vector.extract_strided_slice %3 {offsets = [0, 1], sizes = [32, 1], strides = [1, 1]} : vector<32x4xf32> to vector<32x1xf32>
    %29 = vector.broadcast %28 : vector<32x1xf32> to vector<32x128xf32>
    %30 = arith.addf %27, %29 : vector<32x128xf32>
    %31 = arith.mulf %30, %30 : vector<32x128xf32>
    %32 = arith.mulf %30, %31 : vector<32x128xf32>
    %cst_18 = arith.constant 4.471500e-02 : f32
    %33 = vector.broadcast %cst_18 : f32 to vector<32x128xf32>
    %34 = arith.mulf %33, %32 : vector<32x128xf32>
    %35 = arith.addf %30, %34 : vector<32x128xf32>
    %cst_19 = arith.constant 0.797884583 : f32
    %36 = vector.broadcast %cst_19 : f32 to vector<32x128xf32>
    %37 = arith.mulf %36, %35 : vector<32x128xf32>
    %38 = math.tanh %37 : vector<32x128xf32>
    %cst_20 = arith.constant 1.000000e+00 : f32
    %39 = vector.broadcast %cst_20 : f32 to vector<32x128xf32>
    %40 = arith.addf %39, %38 : vector<32x128xf32>
    %cst_21 = arith.constant 5.000000e-01 : f32
    %41 = vector.broadcast %cst_21 : f32 to vector<32x128xf32>
    %42 = arith.mulf %41, %40 : vector<32x128xf32>
    %43 = arith.mulf %30, %42 : vector<32x128xf32>
    %c0_22 = arith.constant 0 : index
    %c0_23 = arith.constant 0 : index
    %44 = vector.load %arg7[%c0_22, %c0_23] : memref<32x32xbf16, #tpu.memory_space<vmem>>, vector<32x32xbf16>
    %45 = arith.truncf %43 : vector<32x128xf32> to vector<32x128xbf16>
    %cst_24 = arith.constant dense<0.000000e+00> : vector<32x128xf32>
    %46 = tpu.matmul %44, %45, %cst_24 {dimension_numbers = #tpu.dot_dimension_numbers<[1], [0], [0], [1], [0, 0, 1, 1], [], []>} : vector<32x32xbf16>, vector<32x128xbf16>, vector<32x128xf32> -> vector<32x128xf32>
    %47 = vector.extract_strided_slice %3 {offsets = [0, 2], sizes = [32, 1], strides = [1, 1]} : vector<32x4xf32> to vector<32x1xf32>
    %48 = vector.broadcast %47 : vector<32x1xf32> to vector<32x128xf32>
    %49 = arith.addf %46, %48 : vector<32x128xf32>
    %50 = arith.mulf %49, %49 : vector<32x128xf32>
    %51 = arith.mulf %49, %50 : vector<32x128xf32>
    %cst_25 = arith.constant 4.471500e-02 : f32
    %52 = vector.broadcast %cst_25 : f32 to vector<32x128xf32>
    %53 = arith.mulf %52, %51 : vector<32x128xf32>
    %54 = arith.addf %49, %53 : vector<32x128xf32>
    %cst_26 = arith.constant 0.797884583 : f32
    %55 = vector.broadcast %cst_26 : f32 to vector<32x128xf32>
    %56 = arith.mulf %55, %54 : vector<32x128xf32>
    %57 = math.tanh %56 : vector<32x128xf32>
    %cst_27 = arith.constant 1.000000e+00 : f32
    %58 = vector.broadcast %cst_27 : f32 to vector<32x128xf32>
    %59 = arith.addf %58, %57 : vector<32x128xf32>
    %cst_28 = arith.constant 5.000000e-01 : f32
    %60 = vector.broadcast %cst_28 : f32 to vector<32x128xf32>
    %61 = arith.mulf %60, %59 : vector<32x128xf32>
    %62 = arith.mulf %49, %61 : vector<32x128xf32>
    %c0_29 = arith.constant 0 : index
    %c0_30 = arith.constant 0 : index
    %63 = vector.load %arg8[%c0_29, %c0_30] : memref<32x32xbf16, #tpu.memory_space<vmem>>, vector<32x32xbf16>
    %64 = arith.truncf %62 : vector<32x128xf32> to vector<32x128xbf16>
    %cst_31 = arith.constant dense<0.000000e+00> : vector<32x128xf32>
    %65 = tpu.matmul %63, %64, %cst_31 {dimension_numbers = #tpu.dot_dimension_numbers<[1], [0], [0], [1], [0, 0, 1, 1], [], []>} : vector<32x32xbf16>, vector<32x128xbf16>, vector<32x128xf32> -> vector<32x128xf32>
    %66 = vector.extract_strided_slice %3 {offsets = [0, 3], sizes = [32, 1], strides = [1, 1]} : vector<32x4xf32> to vector<32x1xf32>
    %67 = vector.broadcast %66 : vector<32x1xf32> to vector<32x128xf32>
    %68 = arith.addf %65, %67 : vector<32x128xf32>
    %69 = arith.mulf %68, %68 : vector<32x128xf32>
    %70 = arith.mulf %68, %69 : vector<32x128xf32>
    %cst_32 = arith.constant 4.471500e-02 : f32
    %71 = vector.broadcast %cst_32 : f32 to vector<32x128xf32>
    %72 = arith.mulf %71, %70 : vector<32x128xf32>
    %73 = arith.addf %68, %72 : vector<32x128xf32>
    %cst_33 = arith.constant 0.797884583 : f32
    %74 = vector.broadcast %cst_33 : f32 to vector<32x128xf32>
    %75 = arith.mulf %74, %73 : vector<32x128xf32>
    %76 = math.tanh %75 : vector<32x128xf32>
    %cst_34 = arith.constant 1.000000e+00 : f32
    %77 = vector.broadcast %cst_34 : f32 to vector<32x128xf32>
    %78 = arith.addf %77, %76 : vector<32x128xf32>
    %cst_35 = arith.constant 5.000000e-01 : f32
    %79 = vector.broadcast %cst_35 : f32 to vector<32x128xf32>
    %80 = arith.mulf %79, %78 : vector<32x128xf32>
    %81 = arith.mulf %68, %80 : vector<32x128xf32>
    %82 = arith.addf %43, %81 : vector<32x128xf32>
    %c0_36 = arith.constant 0 : index
    %c0_37 = arith.constant 0 : index
    %c0_38 = arith.constant 0 : index
    %83 = vector.load %arg10[%c0_36, %c0_37, %c0_38] : memref<1x32x128xf32, #tpu.memory_space<vmem>>, vector<1x32x128xf32>
    %84 = vector.shape_cast %83 : vector<1x32x128xf32> to vector<32x128xf32>
    %85 = vector.shape_cast %82 : vector<32x128xf32> to vector<1x32x128xf32>
    tpu.vector_store %arg10[%c0_36, %c0_37, %c0_38], %85 {strides = array<i32>} : memref<1x32x128xf32, #tpu.memory_space<vmem>>, vector<1x32x128xf32>,
    return
  }
  func.func @transform_0(%arg0: i32, %arg1: i32) -> (i32, i32, i32) {
    %c0_i32 = arith.constant 0 : i32
    %c0_i32_0 = arith.constant 0 : i32
    return %arg1, %c0_i32, %arg0 : i32, i32, i32
  }
  func.func @transform_1(%arg0: i32, %arg1: i32) -> (i32, i32) {
    %c0_i32 = arith.constant 0 : i32
    %c0_i32_0 = arith.constant 0 : i32
    return %c0_i32, %arg0 : i32, i32
  }
  func.func @transform_2(%arg0: i32, %arg1: i32) -> (i32, i32) {
    %c0_i32 = arith.constant 0 : i32
    %c0_i32_0 = arith.constant 0 : i32
    %c0_i32_1 = arith.constant 0 : i32
    return %c0_i32, %c0_i32_0 : i32, i32
  }
  func.func @transform_3(%arg0: i32, %arg1: i32) -> (i32, i32) {
    %c0_i32 = arith.constant 0 : i32
    %c0_i32_0 = arith.constant 0 : i32
    %c0_i32_1 = arith.constant 0 : i32
    return %c0_i32, %c0_i32_0 : i32, i32
  }
  func.func @transform_4(%arg0: i32, %arg1: i32) -> (i32, i32) {
    %c0_i32 = arith.constant 0 : i32
    %c0_i32_0 = arith.constant 0 : i32
    %c0_i32_1 = arith.constant 0 : i32
    return %c0_i32, %c0_i32_0 : i32, i32
  }
  func.func @transform_5(%arg0: i32, %arg1: i32) -> (i32, i32) {
    %c0_i32 = arith.constant 0 : i32
    %c0_i32_0 = arith.constant 0 : i32
    %c0_i32_1 = arith.constant 0 : i32
    return %c0_i32, %c0_i32_0 : i32, i32
  }
  func.func @transform_6(%arg0: i32, %arg1: i32) -> (i32, i32) {
    %c0_i32 = arith.constant 0 : i32
    %c0_i32_0 = arith.constant 0 : i32
    %c0_i32_1 = arith.constant 0 : i32
    return %c0_i32, %c0_i32_0 : i32, i32
  }
  func.func @transform_7(%arg0: i32, %arg1: i32) -> (i32, i32) {
    %c0_i32 = arith.constant 0 : i32
    %c0_i32_0 = arith.constant 0 : i32
    %c0_i32_1 = arith.constant 0 : i32
    return %c0_i32, %c0_i32_0 : i32, i32
  }
  func.func @transform_8(%arg0: i32, %arg1: i32) -> (i32, i32, i32) {
    %c0_i32 = arith.constant 0 : i32
    %c0_i32_0 = arith.constant 0 : i32
    return %arg1, %c0_i32, %arg0 : i32, i32, i32
  }
}

</mosaic_0001>

<llo_original>
// kernel: tpu_custom_call.1
$region0: #{tpu_custom_call.1}
  #allocation0 [shape = 'u32[]', space=smem, size = 0x4, offset = 0x4, fixed_abs, tag = 'smem constant byte address 0x4 - core index']
  #allocation1 [shape = 'u32[144,128]{1,0:T(1,128)}', space=vmem, size = 0x12000, scoped, tag = 'internal scratch']
  %s0 = inlined_call_operand.vmem [shape: f32[2,2,128], index: 0, kind: input, shape index: {}]
  %s1 = inlined_call_operand.vmem [shape: f32[7,128], index: 1, kind: input, shape index: {}]
  %s2 = inlined_call_operand.vmem [shape: f32[32,2], index: 2, kind: input, shape index: {}]
  %s3 = inlined_call_operand.vmem [shape: f32[32,7], index: 3, kind: input, shape index: {}]
  %s4 = inlined_call_operand.vmem [shape: bf16[32,32], index: 4, kind: input, shape index: {}]
  %s5 = inlined_call_operand.vmem [shape: bf16[32,32], index: 5, kind: input, shape index: {}]
  %s6 = inlined_call_operand.vmem [shape: bf16[32,32], index: 6, kind: input, shape index: {}]
  %s7 = inlined_call_operand.vmem [shape: f32[32,4], index: 7, kind: input, shape index: {}]
  %s8 = inlined_call_operand.hbm [shape: f32[2,32,128], index: 8, kind: output, shape index: {}]
  %s9 = sld [smem:[#allocation0]]
  $region65: #{tpu_custom_call.1} parent=0
    _
  %s11 = ssub.s32 1, %s9
  %s12 = scalar_select 0, %s11, %s9
  $region1: #{tpu_custom_call.1} parent=0
    #allocation2 [shape = 'u8[32768]{0}', space=vmem, size = 0x8000, scoped, tag = 'output window, operand 0']
    #allocation3 [shape = 's32[2]{0}', space=sflag, size = 0x8, scoped, tag = 'scoped memory for tpu_custom_call.1']
    %13 = vsyncpa [#allocation3], 0
    %s14 = scalar_lea.sflag [#allocation3], 1
    %15 = vsyncpa %s14, 0
    loop: start=0, step=1, limit=4
    $region2: #{tpu_custom_call.1} parent=1 // loop_pre_header
      _
    $region3: #{tpu_custom_call.1} parent=1 // loop_header
      %s17 = sphi 0, %s21
      %p18 = scmp.ge.s32.totalorder %s17, 4
      %s24 = sphi 0, %s36
      %s25 = sphi 0, %s32
      %s26 = sphi 0, %s24
      %s27 = sphi 0, %s25
      %s28 = sphi 0, %s26
      %s29 = sphi 0, %s27
      %s41 = sphi 0, %s43
      %s44 = sphi 0, %s41
      %s45 = sphi 0, %s44
      %s61 = sphi 0, %s45
      %s67 = sphi 0, %s69
      %s70 = sphi 0, %s67
      %s71 = sphi 0, %s70
      %s87 = sphi 0, %s71
      %s91 = sphi 0, %s91
      %s93 = sphi 0, %s91
      %s94 = sphi 0, %s93
      %s108 = sphi 0, %s94
      %s112 = sphi 0, %s112
      %s114 = sphi 0, %s112
      %s115 = sphi 0, %s114
      %s129 = sphi 0, %s115
      %s133 = sphi 0, %s133
      %s135 = sphi 0, %s133
      %s136 = sphi 0, %s135
      %s150 = sphi 0, %s136
      %s154 = sphi 0, %s154
      %s156 = sphi 0, %s154
      %s157 = sphi 0, %s156
      %s171 = sphi 0, %s157
      %s175 = sphi 0, %s175
      %s177 = sphi 0, %s175
      %s178 = sphi 0, %s177
      %s192 = sphi 0, %s178
      %s196 = sphi 0, %s196
      %s198 = sphi 0, %s196
      %s199 = sphi 0, %s198
      %s213 = sphi 0, %s199
      %s221 = sphi 0, %s223
      %s224 = sphi 0, %s221
      %s225 = sphi 0, %s224
      %s241 = sphi 0, %s225
    $region4: #{tpu_custom_call.1} parent=1 // loop_header_branch
      %20 = sbr.rel (%p18) target = $region8
    $region5: #{tpu_custom_call.1} parent=1 // loop_body
      %s22 = ssub.s32 %s17, 1
      %s23 = ssub.s32 %s17, 2
      %s30 = sadd.s32 1, %s25
      %p31 = scmp.ge.s32.totalorder %s30, 2
      %s32 = scalar_select %p31, 0, %s30
      %s33 = sadd.s32 1, %s24
      %s34 = scalar_select %p31, %s33, %s24
      %p35 = scmp.ge.s32.totalorder %s34, 1
      %s36 = scalar_select %p35, 0, %s34
      %s37 = ssub.s32 %s25, %s32
      %s38 = ssub.s32 %s24, %s36
      %s39 = sor.u32 %s37, %s38
      %p40 = scmp.eq.s32.totalorder %s39, 0
      %s42 = sadd.s32 %s41, 1
      %s43 = scalar_select %p40, %s41, %s42
      %p46 = pneg %p40
      %p47 = scmp.eq.s32.totalorder %s17, 1
      %p48 = por %p46, %p47
      %p49 = scmp.ne.s32.totalorder %s41, %s44
      %p50 = scmp.eq.s32.totalorder %s17, 0
      %p51 = por %p49, %p50
      %p52 = scmp.ne.s32.totalorder %s41, %s44
      %p53 = scmp.eq.s32.totalorder %s22, 1
      %p54 = por %p52, %p53
      %p55 = scmp.ne.s32.totalorder %s44, %s45
      %p56 = scmp.eq.s32.totalorder %s22, 0
      %p57 = por %p55, %p56
      %p58 = scmp.ne.s32.totalorder %s44, %s45
      %p59 = scmp.eq.s32.totalorder %s23, 1
      %p60 = por %p58, %p59
      %p62 = scmp.ne.s32.totalorder %s45, %s61
      %p63 = scmp.eq.s32.totalorder %s23, 0
      %p64 = por %p62, %p63
      %s65 = ssub.s32 %s24, %s36
      %p66 = scmp.eq.s32.totalorder %s65, 0
      %s68 = sadd.s32 %s67, 1
      %s69 = scalar_select %p66, %s67, %s68
      %p72 = pneg %p66
      %p73 = scmp.eq.s32.totalorder %s17, 1
      %p74 = por %p72, %p73
      %p75 = scmp.ne.s32.totalorder %s67, %s70
      %p76 = scmp.eq.s32.totalorder %s17, 0
      %p77 = por %p75, %p76
      %p78 = scmp.ne.s32.totalorder %s67, %s70
      %p79 = scmp.eq.s32.totalorder %s22, 1
      %p80 = por %p78, %p79
      %p81 = scmp.ne.s32.totalorder %s70, %s71
      %p82 = scmp.eq.s32.totalorder %s22, 0
      %p83 = por %p81, %p82
      %p84 = scmp.ne.s32.totalorder %s70, %s71
      %p85 = scmp.eq.s32.totalorder %s23, 1
      %p86 = por %p84, %p85
      %p88 = scmp.ne.s32.totalorder %s71, %s87
      %p89 = scmp.eq.s32.totalorder %s23, 0
      %p90 = por %p88, %p89
      %s92 = sadd.s32 %s91, 1
      %p95 = scmp.eq.s32.totalorder %s17, 1
      %p96 = scmp.ne.s32.totalorder %s91, %s93
      %p97 = scmp.eq.s32.totalorder %s17, 0
      %p98 = por %p96, %p97
      %p99 = scmp.ne.s32.totalorder %s91, %s93
      %p100 = scmp.eq.s32.totalorder %s22, 1
      %p101 = por %p99, %p100
      %p102 = scmp.ne.s32.totalorder %s93, %s94
      %p103 = scmp.eq.s32.totalorder %s22, 0
      %p104 = por %p102, %p103
      %p105 = scmp.ne.s32.totalorder %s93, %s94
      %p106 = scmp.eq.s32.totalorder %s23, 1
      %p107 = por %p105, %p106
      %p109 = scmp.ne.s32.totalorder %s94, %s108
      %p110 = scmp.eq.s32.totalorder %s23, 0
      %p111 = por %p109, %p110
      %s113 = sadd.s32 %s112, 1
      %p116 = scmp.eq.s32.totalorder %s17, 1
      %p117 = scmp.ne.s32.totalorder %s112, %s114
      %p118 = scmp.eq.s32.totalorder %s17, 0
      %p119 = por %p117, %p118
      %p120 = scmp.ne.s32.totalorder %s112, %s114
      %p121 = scmp.eq.s32.totalorder %s22, 1
      %p122 = por %p120, %p121
      %p123 = scmp.ne.s32.totalorder %s114, %s115
      %p124 = scmp.eq.s32.totalorder %s22, 0
      %p125 = por %p123, %p124
      %p126 = scmp.ne.s32.totalorder %s114, %s115
      %p127 = scmp.eq.s32.totalorder %s23, 1
      %p128 = por %p126, %p127
      %p130 = scmp.ne.s32.totalorder %s115, %s129
      %p131 = scmp.eq.s32.totalorder %s23, 0
      %p132 = por %p130, %p131
      %s134 = sadd.s32 %s133, 1
      %p137 = scmp.eq.s32.totalorder %s17, 1
      %p138 = scmp.ne.s32.totalorder %s133, %s135
      %p139 = scmp.eq.s32.totalorder %s17, 0
      %p140 = por %p138, %p139
      %p141 = scmp.ne.s32.totalorder %s133, %s135
      %p142 = scmp.eq.s32.totalorder %s22, 1
      %p143 = por %p141, %p142
      %p144 = scmp.ne.s32.totalorder %s135, %s136
      %p145 = scmp.eq.s32.totalorder %s22, 0
      %p146 = por %p144, %p145
      %p147 = scmp.ne.s32.totalorder %s135, %s136
      %p148 = scmp.eq.s32.totalorder %s23, 1
      %p149 = por %p147, %p148
      %p151 = scmp.ne.s32.totalorder %s136, %s150
      %p152 = scmp.eq.s32.totalorder %s23, 0
      %p153 = por %p151, %p152
      %s155 = sadd.s32 %s154, 1
      %p158 = scmp.eq.s32.totalorder %s17, 1
      %p159 = scmp.ne.s32.totalorder %s154, %s156
      %p160 = scmp.eq.s32.totalorder %s17, 0
      %p161 = por %p159, %p160
      %p162 = scmp.ne.s32.totalorder %s154, %s156
      %p163 = scmp.eq.s32.totalorder %s22, 1
      %p164 = por %p162, %p163
      %p165 = scmp.ne.s32.totalorder %s156, %s157
      %p166 = scmp.eq.s32.totalorder %s22, 0
      %p167 = por %p165, %p166
      %p168 = scmp.ne.s32.totalorder %s156, %s157
      %p169 = scmp.eq.s32.totalorder %s23, 1
      %p170 = por %p168, %p169
      %p172 = scmp.ne.s32.totalorder %s157, %s171
      %p173 = scmp.eq.s32.totalorder %s23, 0
      %p174 = por %p172, %p173
      %s176 = sadd.s32 %s175, 1
      %p179 = scmp.eq.s32.totalorder %s17, 1
      %p180 = scmp.ne.s32.totalorder %s175, %s177
      %p181 = scmp.eq.s32.totalorder %s17, 0
      %p182 = por %p180, %p181
      %p183 = scmp.ne.s32.totalorder %s175, %s177
      %p184 = scmp.eq.s32.totalorder %s22, 1
      %p185 = por %p183, %p184
      %p186 = scmp.ne.s32.totalorder %s177, %s178
      %p187 = scmp.eq.s32.totalorder %s22, 0
      %p188 = por %p186, %p187
      %p189 = scmp.ne.s32.totalorder %s177, %s178
      %p190 = scmp.eq.s32.totalorder %s23, 1
      %p191 = por %p189, %p190
      %p193 = scmp.ne.s32.totalorder %s178, %s192
      %p194 = scmp.eq.s32.totalorder %s23, 0
      %p195 = por %p193, %p194
      %s197 = sadd.s32 %s196, 1
      %p200 = scmp.eq.s32.totalorder %s17, 1
      %p201 = scmp.ne.s32.totalorder %s196, %s198
      %p202 = scmp.eq.s32.totalorder %s17, 0
      %p203 = por %p201, %p202
      %p204 = scmp.ne.s32.totalorder %s196, %s198
      %p205 = scmp.eq.s32.totalorder %s22, 1
      %p206 = por %p204, %p205
      %p207 = scmp.ne.s32.totalorder %s198, %s199
      %p208 = scmp.eq.s32.totalorder %s22, 0
      %p209 = por %p207, %p208
      %p210 = scmp.ne.s32.totalorder %s198, %s199
      %p211 = scmp.eq.s32.totalorder %s23, 1
      %p212 = por %p210, %p211
      %p214 = scmp.ne.s32.totalorder %s199, %s213
      %p215 = scmp.eq.s32.totalorder %s23, 0
      %p216 = por %p214, %p215
      %s217 = ssub.s32 %s25, %s32
      %s218 = ssub.s32 %s24, %s36
      %s219 = sor.u32 %s217, %s218
      %p220 = scmp.eq.s32.totalorder %s219, 0
      %s222 = sadd.s32 %s221, 1
      %s223 = scalar_select %p220, %s221, %s222
      %p226 = pneg %p220
      %p227 = scmp.eq.s32.totalorder %s17, 1
      %p228 = por %p226, %p227
      %p229 = scmp.ne.s32.totalorder %s221, %s224
      %p230 = scmp.eq.s32.totalorder %s17, 0
      %p231 = por %p229, %p230
      %p232 = scmp.ne.s32.totalorder %s221, %s224
      %p233 = scmp.eq.s32.totalorder %s22, 1
      %p234 = por %p232, %p233
      %p235 = scmp.ne.s32.totalorder %s224, %s225
      %p236 = scmp.eq.s32.totalorder %s22, 0
      %p237 = por %p235, %p236
      %p238 = scmp.ne.s32.totalorder %s224, %s225
      %p239 = scmp.eq.s32.totalorder %s23, 1
      %p240 = por %p238, %p239
      %p242 = scmp.ne.s32.totalorder %s225, %s241
      %p243 = scmp.eq.s32.totalorder %s23, 0
      %p244 = por %p242, %p243
      %p245 = scmp.le.s32.totalorder 1, %s17
      %p246 = scmp.lt.s32.totalorder %s17, 3
      %p247 = pnand %p245, %p246
      %p248 = pneg %p247
      // Predicated region
      $region9: #{tpu_custom_call.1} parent=5 // pred_check
        _
      $region10: #{tpu_custom_call.1} parent=5 // pred_check_branch
        %250 = sbr.rel (%p247) target = $region12
      $region11: #{tpu_custom_call.1} parent=5 // pred_region
        %s251 = ssub.s32 %s17, 1
        // Predicated region
        $region13: #{tpu_custom_call.1} parent=11 // pred_check
          %p252 = pneg %p83
        $region14: #{tpu_custom_call.1} parent=11 // pred_check_branch
          %254 = sbr.rel (%p252) target = $region16
        $region15: #{tpu_custom_call.1} parent=11 // pred_region
          %p255 = scmp.lt.s32.totalorder %s26, 0
          %s256 = scalar_select %p255, %s26, 0
          %s257 = smul.addr %s256, 8
          %s258 = scalar_lea.vmem %s1, %s257
        $region16: #{tpu_custom_call.1} parent=11 // pred_fallthru
          _
        // Predicated region
        $region17: #{tpu_custom_call.1} parent=11 // pred_check
          %p259 = pneg %p104
        $region18: #{tpu_custom_call.1} parent=11 // pred_check_branch
          %261 = sbr.rel (%p259) target = $region20
        $region19: #{tpu_custom_call.1} parent=11 // pred_region
          _
        $region20: #{tpu_custom_call.1} parent=11 // pred_fallthru
          _
        // Predicated region
        $region21: #{tpu_custom_call.1} parent=11 // pred_check
          %p262 = pneg %p125
        $region22: #{tpu_custom_call.1} parent=11 // pred_check_branch
          %264 = sbr.rel (%p262) target = $region24
        $region23: #{tpu_custom_call.1} parent=11 // pred_region
          _
        $region24: #{tpu_custom_call.1} parent=11 // pred_fallthru
          _
        // Predicated region
        $region25: #{tpu_custom_call.1} parent=11 // pred_check
          %p265 = pneg %p146
        $region26: #{tpu_custom_call.1} parent=11 // pred_check_branch
          %267 = sbr.rel (%p265) target = $region28
        $region27: #{tpu_custom_call.1} parent=11 // pred_region
          _
        $region28: #{tpu_custom_call.1} parent=11 // pred_fallthru
          _
        // Predicated region
        $region29: #{tpu_custom_call.1} parent=11 // pred_check
          %p268 = pneg %p167
        $region30: #{tpu_custom_call.1} parent=11 // pred_check_branch
          %270 = sbr.rel (%p268) target = $region32
        $region31: #{tpu_custom_call.1} parent=11 // pred_region
          _
        $region32: #{tpu_custom_call.1} parent=11 // pred_fallthru
          _
        // Predicated region
        $region33: #{tpu_custom_call.1} parent=11 // pred_check
          %p271 = pneg %p188
        $region34: #{tpu_custom_call.1} parent=11 // pred_check_branch
          %273 = sbr.rel (%p271) target = $region36
        $region35: #{tpu_custom_call.1} parent=11 // pred_region
          _
        $region36: #{tpu_custom_call.1} parent=11 // pred_fallthru
          _
        // Predicated region
        $region37: #{tpu_custom_call.1} parent=11 // pred_check
          %p274 = pneg %p209
        $region38: #{tpu_custom_call.1} parent=11 // pred_check_branch
          %276 = sbr.rel (%p274) target = $region40
        $region39: #{tpu_custom_call.1} parent=11 // pred_region
          _
        $region40: #{tpu_custom_call.1} parent=11 // pred_fallthru
          _
      $region12: #{tpu_custom_call.1} parent=5 // pred_fallthru
        _
      %p277 = scmp.lt.s32.totalorder %s17, 2
      // Predicated region
      $region41: #{tpu_custom_call.1} parent=5 // pred_check
        %p278 = pneg %p277
      $region42: #{tpu_custom_call.1} parent=5 // pred_check_branch
        %280 = sbr.rel (%p278) target = $region44
      $region43: #{tpu_custom_call.1} parent=5 // pred_region
        // Predicated region
        $region45: #{tpu_custom_call.1} parent=43 // pred_check
          %p281 = pneg %p51
        $region46: #{tpu_custom_call.1} parent=43 // pred_check_branch
          %283 = sbr.rel (%p281) target = $region48
        $region47: #{tpu_custom_call.1} parent=43 // pred_region
          %p284 = scmp.lt.s32.totalorder %s25, 1
          %s285 = scalar_select %p284, %s25, 1
          %p286 = scmp.lt.s32.totalorder %s24, 0
          %s287 = scalar_select %p286, %s24, 0
          %s288 = sadd.s32 %s287, %s285
          %s289 = smul.addr %s288, 2
          %s290 = scalar_lea.vmem %s0, %s289
        $region48: #{tpu_custom_call.1} parent=43 // pred_fallthru
          _
      $region44: #{tpu_custom_call.1} parent=5 // pred_fallthru
        _
      %p291 = scmp.le.s32.totalorder 1, %s17
      %p292 = scmp.lt.s32.totalorder %s17, 3
      %p293 = pnand %p291, %p292
      %p294 = pneg %p293
      // Predicated region
      $region49: #{tpu_custom_call.1} parent=5 // pred_check
        _
      $region50: #{tpu_custom_call.1} parent=5 // pred_check_branch
        %296 = sbr.rel (%p293) target = $region52
      $region51: #{tpu_custom_call.1} parent=5 // pred_region
        %s297 = ssub.s32 %s17, 1
        %p298 = scmp.lt.s32.totalorder %s27, 1
        %s299 = scalar_select %p298, %s27, 1
        %p300 = scmp.lt.s32.totalorder %s26, 0
        %s301 = scalar_select %p300, %s26, 0
        %s302 = sadd.s32 %s301, %s299
        %s303 = smul.addr %s302, 2
        %s304 = scalar_lea.vmem %s0, %s303
        %p305 = pneg %p57
        %p306 = pneg %p54
        %p307 = scmp.lt.s32.totalorder %s26, 0
        %s308 = scalar_select %p307, %s26, 0
        %s309 = smul.addr %s308, 8
        %s310 = scalar_lea.vmem %s1, %s309
        %p311 = pneg %p83
        %p312 = pneg %p80
        %p313 = pneg %p104
        %p314 = pneg %p101
        %p315 = pneg %p125
        %p316 = pneg %p122
        %p317 = pneg %p146
        %p318 = pneg %p143
        %p319 = pneg %p167
        %p320 = pneg %p164
        %p321 = pneg %p188
        %p322 = pneg %p185
        %p323 = pneg %p209
        %p324 = pneg %p206
        %p325 = pneg %p237
        %p326 = pneg %p234
        %s327 = sand.u32 %s224, 1
        %s328 = scalar_lea.sflag [#allocation3], %s327
        %s329 = sand.u32 %s224, 1
        %s330 = smul.addr %s329, 32
        %s331 = scalar_lea.vmem [#allocation2], %s330
        %p332 = scmp.lt.s32.totalorder %s27, 1
        %s333 = scalar_select %p332, %s27, 1
        %p334 = scmp.lt.s32.totalorder %s26, 0
        %s335 = scalar_select %p334, %s26, 0
        %s336 = sadd.s32 %s335, %s333
        %s337 = smul.addr %s336, 2
        %s338 = scalar_lea.vmem %s0, %s337
        %p339 = scmp.lt.s32.totalorder %s26, 0
        %s340 = scalar_select %p339, %s26, 0
        %s341 = smul.addr %s340, 8
        %s342 = scalar_lea.vmem %s1, %s341
        %v344 = vld [vmem:[%s338] sm:$0x3]
        %v345 = vld [vmem:[%s342] sm:$0x7f]
        %v346 = vld [vmem:[%s7] sm:$0xff]
        %v347 = vld [vmem:[%s7 + $0x8] sm:$0xff]
        %v348 = vld [vmem:[%s7 + $0x10] sm:$0xff]
        %v349 = vld [vmem:[%s7 + $0x18] sm:$0xff]
        %v350 = vld [vmem:[%s2] sm:$0xff]
        %v351 = vld [vmem:[%s2 + $0x8] sm:$0xff]
        %v352 = vld [vmem:[%s2 + $0x10] sm:$0xff]
        %v353 = vld [vmem:[%s2 + $0x18] sm:$0xff]
        %v354 = vld [vmem:[%s3] sm:$0xff]
        %v355 = vld [vmem:[%s3 + $0x8] sm:$0xff]
        %v356 = vld [vmem:[%s3 + $0x10] sm:$0xff]
        %v357 = vld [vmem:[%s3 + $0x18] sm:$0xff]
        %vm358 = vcmask 56320
        %v360 = vsel %vm358, %v354, 0
        %v363 = vsel %vm358, %v355, 0
        %v366 = vsel %vm358, %v356, 0
        %v369 = vsel %vm358, %v357, 0
        %vm371 = vcmask 1046528
        %v373 = vsel %vm371, %v345, 0
        %375 = vmatprep.subr.mxu0 0.0
        %376 = vmatpush1.msra.mxu0 %v373
        %377 = vmatprep.subr.mxu0 0.0
        %378 = vmatpush1.msra.mxu0 0.0
        %379 = vmatprep.subr.mxu0 0.0
        %380 = vmatpush1.msra.mxu0 0.0
        %381 = vmatprep.subr.mxu0 0.0
        %382 = vmatpush1.msra.mxu0 0.0
        %383 = vmatprep.subr.mxu0 0.0
        %384 = vmatpush1.msra.mxu0 0.0
        %385 = vmatprep.subr.mxu0 0.0
        %386 = vmatpush1.msra.mxu0 0.0
        %387 = vmatprep.subr.mxu0 0.0
        %388 = vmatpush1.msra.mxu0 0.0
        %389 = vmatprep.subr.mxu0 0.0
        %390 = vmatpush1.msra.mxu0 0.0
        %391 = vmatprep.subr.mxu0 0.0
        %392 = vmatpush1.msra.mxu0 0.0
        %393 = vmatprep.subr.mxu0 0.0
        %394 = vmatpush1.msra.mxu0 0.0
        %395 = vmatprep.subr.mxu0 0.0
        %396 = vmatpush1.msra.mxu0 0.0
        %397 = vmatprep.subr.mxu0 0.0
        %398 = vmatpush1.msra.mxu0 0.0
        %399 = vmatprep.subr.mxu0 0.0
        %400 = vmatpush1.msra.mxu0 0.0
        %401 = vmatprep.subr.mxu0 0.0
        %402 = vmatpush1.msra.mxu0 0.0
        %403 = vmatprep.subr.mxu0 0.0
        %404 = vmatpush1.msra.mxu0 0.0
        %405 = vmatprep.subr.mxu0 0.0
        %406 = vmatpush1.msra.mxu0 0.0
        %407 = vmatprep.subr.mxu0 0.0
        %408 = vmatpush1.msra.mxu0 0.0
        %409 = vmatprep.subr.mxu0 0.0
        %410 = vmatpush1.msra.mxu0 0.0
        %411 = vmatprep.subr.mxu0 0.0
        %412 = vmatpush1.msra.mxu0 0.0
        %413 = vmatprep.subr.mxu0 0.0
        %414 = vmatpush1.msra.mxu0 0.0
        %415 = vmatprep.subr.mxu0 0.0
        %416 = vmatpush1.msra.mxu0 0.0
        %417 = vmatprep.subr.mxu0 0.0
        %418 = vmatpush1.msra.mxu0 0.0
        %419 = vmatprep.subr.mxu0 0.0
        %420 = vmatpush1.msra.mxu0 0.0
        %421 = vmatprep.subr.mxu0 0.0
        %422 = vmatpush1.msra.mxu0 0.0
        %423 = vmatprep.subr.mxu0 0.0
        %424 = vmatpush1.msra.mxu0 0.0
        %425 = vmatprep.subr.mxu0 0.0
        %426 = vmatpush1.msra.mxu0 0.0
        %427 = vmatprep.subr.mxu0 0.0
        %428 = vmatpush1.msra.mxu0 0.0
        %429 = vmatprep.subr.mxu0 0.0
        %430 = vmatpush1.msra.mxu0 0.0
        %431 = vmatprep.subr.mxu0 0.0
        %432 = vmatpush1.msra.mxu0 0.0
        %433 = vmatprep.subr.mxu0 0.0
        %434 = vmatpush1.msra.mxu0 0.0
        %435 = vmatprep.subr.mxu0 0.0
        %436 = vmatpush1.msra.mxu0 0.0
        %437 = vmatprep.subr.mxu0 0.0
        %438 = vmatpush1.msra.mxu0 0.0
        %439 = vmatprep.mubr.f32.mxu0 0.0
        %440 = vmatmul.mubr.f32.gmra.mrb[0].mxu0 %v360
        %v441 = vpop.f32.mrb[0].mxu0
        %v442 = vadd.f32 0.0, %v441
        %v443 = vpop.f32.mrb[0].mxu0
        %444 = vmatprep.mubr.f32.mxu0 0.0
        %445 = vmatmul.mubr.f32.gmra.mrb[0].mxu0 %v363
        %v446 = vpop.f32.mrb[0].mxu0
        %v447 = vadd.f32 0.0, %v446
        %v448 = vpop.f32.mrb[0].mxu0
        %449 = vmatprep.mubr.f32.mxu0 0.0
        %450 = vmatmul.mubr.f32.gmra.mrb[0].mxu0 %v366
        %v451 = vpop.f32.mrb[0].mxu0
        %v452 = vadd.f32 0.0, %v451
        %v453 = vpop.f32.mrb[0].mxu0
        %454 = vmatprep.mubr.f32.mxu0 0.0
        %455 = vmatmul.mubr.f32.gmra.mrb[0].mxu0 %v369
        %v456 = vpop.f32.mrb[0].mxu0
        %v457 = vadd.f32 0.0, %v456
        %v458 = vpop.f32.mrb[0].mxu0
        %459 = vdwg.mxu0
        %vm460 = vcmask 15360
        %v462 = vsel %vm460, %v350, 0
        %v465 = vsel %vm460, %v351, 0
        %v468 = vsel %vm460, %v352, 0
        %v471 = vsel %vm460, %v353, 0
        %vm473 = vcmask 1041408
        %v475 = vsel %vm473, %v344, 0
        %477 = vmatprep.subr.mxu0 0.0
        %478 = vmatpush1.msra.mxu0 %v475
        %479 = vmatprep.subr.mxu0 0.0
        %480 = vmatpush1.msra.mxu0 0.0
        %481 = vmatprep.subr.mxu0 0.0
        %482 = vmatpush1.msra.mxu0 0.0
        %483 = vmatprep.subr.mxu0 0.0
        %484 = vmatpush1.msra.mxu0 0.0
        %485 = vmatprep.subr.mxu0 0.0
        %486 = vmatpush1.msra.mxu0 0.0
        %487 = vmatprep.subr.mxu0 0.0
        %488 = vmatpush1.msra.mxu0 0.0
        %489 = vmatprep.subr.mxu0 0.0
        %490 = vmatpush1.msra.mxu0 0.0
        %491 = vmatprep.subr.mxu0 0.0
        %492 = vmatpush1.msra.mxu0 0.0
        %493 = vmatprep.subr.mxu0 0.0
        %494 = vmatpush1.msra.mxu0 0.0
        %495 = vmatprep.subr.mxu0 0.0
        %496 = vmatpush1.msra.mxu0 0.0
        %497 = vmatprep.subr.mxu0 0.0
        %498 = vmatpush1.msra.mxu0 0.0
        %499 = vmatprep.subr.mxu0 0.0
        %500 = vmatpush1.msra.mxu0 0.0
        %501 = vmatprep.subr.mxu0 0.0
        %502 = vmatpush1.msra.mxu0 0.0
        %503 = vmatprep.subr.mxu0 0.0
        %504 = vmatpush1.msra.mxu0 0.0
        %505 = vmatprep.subr.mxu0 0.0
        %506 = vmatpush1.msra.mxu0 0.0
        %507 = vmatprep.subr.mxu0 0.0
        %508 = vmatpush1.msra.mxu0 0.0
        %509 = vmatprep.subr.mxu0 0.0
        %510 = vmatpush1.msra.mxu0 0.0
        %511 = vmatprep.subr.mxu0 0.0
        %512 = vmatpush1.msra.mxu0 0.0
        %513 = vmatprep.subr.mxu0 0.0
        %514 = vmatpush1.msra.mxu0 0.0
        %515 = vmatprep.subr.mxu0 0.0
        %516 = vmatpush1.msra.mxu0 0.0
        %517 = vmatprep.subr.mxu0 0.0
        %518 = vmatpush1.msra.mxu0 0.0
        %519 = vmatprep.subr.mxu0 0.0
        %520 = vmatpush1.msra.mxu0 0.0
        %521 = vmatprep.subr.mxu0 0.0
        %522 = vmatpush1.msra.mxu0 0.0
        %523 = vmatprep.subr.mxu0 0.0
        %524 = vmatpush1.msra.mxu0 0.0
        %525 = vmatprep.subr.mxu0 0.0
        %526 = vmatpush1.msra.mxu0 0.0
        %527 = vmatprep.subr.mxu0 0.0
        %528 = vmatpush1.msra.mxu0 0.0
        %529 = vmatprep.subr.mxu0 0.0
        %530 = vmatpush1.msra.mxu0 0.0
        %531 = vmatprep.subr.mxu0 0.0
        %532 = vmatpush1.msra.mxu0 0.0
        %533 = vmatprep.subr.mxu0 0.0
        %534 = vmatpush1.msra.mxu0 0.0
        %535 = vmatprep.subr.mxu0 0.0
        %536 = vmatpush1.msra.mxu0 0.0
        %537 = vmatprep.subr.mxu0 0.0
        %538 = vmatpush1.msra.mxu0 0.0
        %539 = vmatprep.subr.mxu0 0.0
        %540 = vmatpush1.msra.mxu0 0.0
        %541 = vmatprep.mubr.f32.mxu0 0.0
        %542 = vmatmul.mubr.f32.gmra.mrb[0].mxu0 %v462
        %v543 = vpop.f32.mrb[0].mxu0
        %v544 = vadd.f32 %v442, %v543
        %v545 = vpop.f32.mrb[0].mxu0
        %546 = vmatprep.mubr.f32.mxu0 0.0
        %547 = vmatmul.mubr.f32.gmra.mrb[0].mxu0 %v465
        %v548 = vpop.f32.mrb[0].mxu0
        %v549 = vadd.f32 %v447, %v548
        %v550 = vpop.f32.mrb[0].mxu0
        %551 = vmatprep.mubr.f32.mxu0 0.0
        %552 = vmatmul.mubr.f32.gmra.mrb[0].mxu0 %v468
        %v553 = vpop.f32.mrb[0].mxu0
        %v554 = vadd.f32 %v452, %v553
        %v555 = vpop.f32.mrb[0].mxu0
        %556 = vmatprep.mubr.f32.mxu0 0.0
        %557 = vmatmul.mubr.f32.gmra.mrb[0].mxu0 %v471
        %v558 = vpop.f32.mrb[0].mxu0
        %v559 = vadd.f32 %v457, %v558
        %v560 = vpop.f32.mrb[0].mxu0
        %561 = vdwg.mxu0
        %563 = vset.pattern.permute.xlu0 0
        %564 = vperm.xlu0 %563, %v346
        %v565 = vpop.permute.xlu0 %564
        %568 = vset.pattern.permute.xlu0 0
        %569 = vperm.xlu0 %568, %v347
        %v570 = vpop.permute.xlu0 %569
        %573 = vset.pattern.permute.xlu0 0
        %574 = vperm.xlu0 %573, %v348
        %v575 = vpop.permute.xlu0 %574
        %578 = vset.pattern.permute.xlu0 0
        %579 = vperm.xlu0 %578, %v349
        %v580 = vpop.permute.xlu0 %579
        %v582 = vadd.f32 %v544, %v565
        %v583 = vadd.f32 %v549, %v570
        %v584 = vadd.f32 %v554, %v575
        %v585 = vadd.f32 %v559, %v580
        %v586 = vmul.f32 %v582, %v582
        %v587 = vmul.f32 %v583, %v583
        %v588 = vmul.f32 %v584, %v584
        %v589 = vmul.f32 %v585, %v585
        %v590 = vmul.f32 %v582, %v586
        %v591 = vmul.f32 %v583, %v587
        %v592 = vmul.f32 %v584, %v588
        %v593 = vmul.f32 %v585, %v589
        %v594 = vmul.f32 %v590, 0.044715
        %v595 = vmul.f32 %v591, 0.044715
        %v596 = vmul.f32 %v592, 0.044715
        %v597 = vmul.f32 %v593, 0.044715
        %v598 = vadd.f32 %v582, %v594
        %v599 = vadd.f32 %v583, %v595
        %v600 = vadd.f32 %v584, %v596
        %v601 = vadd.f32 %v585, %v597
        %v602 = vmul.f32 %v598, 0.7978846
        %v603 = vmul.f32 %v599, 0.7978846
        %v604 = vmul.f32 %v600, 0.7978846
        %v605 = vmul.f32 %v601, 0.7978846
        %v606 = vtanh.pop %v602
        %v607 = vtanh.pop %v603
        %v608 = vtanh.pop %v604
        %v609 = vtanh.pop %v605
        %v610 = vadd.f32 %v606, 1.0
        %v611 = vadd.f32 %v607, 1.0
        %v612 = vadd.f32 %v608, 1.0
        %v613 = vadd.f32 %v609, 1.0
        %v614 = vmul.f32 %v610, 0.5
        %v615 = vmul.f32 %v611, 0.5
        %v616 = vmul.f32 %v612, 0.5
        %v617 = vmul.f32 %v613, 0.5
        %v618 = vmul.f32 %v582, %v614
        %v619 = vmul.f32 %v583, %v615
        %v620 = vmul.f32 %v584, %v616
        %v621 = vmul.f32 %v585, %v617
        %v622 = vld [vmem:[%s4] sm:$0xf]
        %v623 = vld [vmem:[%s4 + $0x4] sm:$0xf]
        %v624 = vld [vmem:[%s4 + $0x8] sm:$0xf]
        %v625 = vld [vmem:[%s4 + $0xc] sm:$0xf]
        %v626 = vpack.c.bf16 %v619, %v618
        %v627 = vpack.c.bf16 %v621, %v620
        %628 = vset.pattern.permute.xlu0 1
        %629 = vperm.xlu0 %628, %v346
        %v630 = vpop.permute.xlu0 %629
        %632 = vset.pattern.permute.xlu0 1
        %633 = vperm.xlu0 %632, %v347
        %v634 = vpop.permute.xlu0 %633
        %636 = vset.pattern.permute.xlu0 1
        %637 = vperm.xlu0 %636, %v348
        %v638 = vpop.permute.xlu0 %637
        %640 = vset.pattern.permute.xlu0 1
        %641 = vperm.xlu0 %640, %v349
        %v642 = vpop.permute.xlu0 %641
        %v648 = vunpack.c.l.b16 %v622
        %v649 = vunpack.c.l.b16 %v623
        %v650 = vunpack.c.l.b16 %v624
        %v651 = vunpack.c.l.b16 %v625
        %v652 = vpack.c.b16 %v649, %v648
        %v653 = vpack.c.b16 %v651, %v650
        %vm654 = vcmask 261120
        %v656 = vsel %vm654, %v652, 0
        %v659 = vsel %vm654, %v653, 0
        %661 = vmatprep.subr.bf16.mxu0 0
        %662 = vmatpush1.bf16.msra.mxu0 %v626
        %663 = vmatprep.subr.bf16.mxu0 0
        %664 = vmatpush1.bf16.msra.mxu0 %v627
        %665 = vmatprep.subr.bf16.mxu0 0
        %666 = vmatpush1.bf16.msra.mxu0 0
        %667 = vmatprep.subr.bf16.mxu0 0
        %668 = vmatpush1.bf16.msra.mxu0 0
        %669 = vmatprep.subr.bf16.mxu0 0
        %670 = vmatpush1.bf16.msra.mxu0 0
        %671 = vmatprep.subr.bf16.mxu0 0
        %672 = vmatpush1.bf16.msra.mxu0 0
        %673 = vmatprep.subr.bf16.mxu0 0
        %674 = vmatpush1.bf16.msra.mxu0 0
        %675 = vmatprep.subr.bf16.mxu0 0
        %676 = vmatpush1.bf16.msra.mxu0 0
        %677 = vmatprep.subr.bf16.mxu0 0
        %678 = vmatpush1.bf16.msra.mxu0 0
        %679 = vmatprep.subr.bf16.mxu0 0
        %680 = vmatpush1.bf16.msra.mxu0 0
        %681 = vmatprep.subr.bf16.mxu0 0
        %682 = vmatpush1.bf16.msra.mxu0 0
        %683 = vmatprep.subr.bf16.mxu0 0
        %684 = vmatpush1.bf16.msra.mxu0 0
        %685 = vmatprep.subr.bf16.mxu0 0
        %686 = vmatpush1.bf16.msra.mxu0 0
        %687 = vmatprep.subr.bf16.mxu0 0
        %688 = vmatpush1.bf16.msra.mxu0 0
        %689 = vmatprep.subr.bf16.mxu0 0
        %690 = vmatpush1.bf16.msra.mxu0 0
        %691 = vmatprep.subr.bf16.mxu0 0
        %692 = vmatpush1.bf16.msra.mxu0 0
        %693 = vmatprep.mubr.bf16.mxu0 0
        %694 = vmatmul.mubr.bf16.gmra.mrb[0].mxu0 %v656
        %v695 = vpop.f32.mrb[0].mxu0
        %v696 = vadd.f32 %v630, %v695
        %v697 = vpop.f32.mrb[0].mxu0
        %v698 = vpop.f32.mrb[0].mxu0
        %v699 = vadd.f32 %v634, %v698
        %v700 = vpop.f32.mrb[0].mxu0
        %701 = vmatprep.mubr.bf16.mxu0 0
        %702 = vmatmul.mubr.bf16.gmra.mrb[0].mxu0 %v659
        %v703 = vpop.f32.mrb[0].mxu0
        %v704 = vadd.f32 %v638, %v703
        %v705 = vpop.f32.mrb[0].mxu0
        %v706 = vpop.f32.mrb[0].mxu0
        %v707 = vadd.f32 %v642, %v706
        %v708 = vpop.f32.mrb[0].mxu0
        %709 = vdwg.mxu0
        %v710 = vmul.f32 %v696, %v696
        %v711 = vmul.f32 %v699, %v699
        %v712 = vmul.f32 %v704, %v704
        %v713 = vmul.f32 %v707, %v707
        %v714 = vmul.f32 %v696, %v710
        %v715 = vmul.f32 %v699, %v711
        %v716 = vmul.f32 %v704, %v712
        %v717 = vmul.f32 %v707, %v713
        %v718 = vmul.f32 %v714, 0.044715
        %v719 = vmul.f32 %v715, 0.044715
        %v720 = vmul.f32 %v716, 0.044715
        %v721 = vmul.f32 %v717, 0.044715
        %v722 = vadd.f32 %v696, %v718
        %v723 = vadd.f32 %v699, %v719
        %v724 = vadd.f32 %v704, %v720
        %v725 = vadd.f32 %v707, %v721
        %v726 = vmul.f32 %v722, 0.7978846
        %v727 = vmul.f32 %v723, 0.7978846
        %v728 = vmul.f32 %v724, 0.7978846
        %v729 = vmul.f32 %v725, 0.7978846
        %v730 = vtanh.pop %v726
        %v731 = vtanh.pop %v727
        %v732 = vtanh.pop %v728
        %v733 = vtanh.pop %v729
        %v734 = vadd.f32 %v730, 1.0
        %v735 = vadd.f32 %v731, 1.0
        %v736 = vadd.f32 %v732, 1.0
        %v737 = vadd.f32 %v733, 1.0
        %v738 = vmul.f32 %v734, 0.5
        %v739 = vmul.f32 %v735, 0.5
        %v740 = vmul.f32 %v736, 0.5
        %v741 = vmul.f32 %v737, 0.5
        %v742 = vmul.f32 %v696, %v738
        %v743 = vmul.f32 %v699, %v739
        %v744 = vmul.f32 %v704, %v740
        %v745 = vmul.f32 %v707, %v741
        %v746 = vld [vmem:[%s5] sm:$0xf]
        %v747 = vld [vmem:[%s5 + $0x4] sm:$0xf]
        %v748 = vld [vmem:[%s5 + $0x8] sm:$0xf]
        %v749 = vld [vmem:[%s5 + $0xc] sm:$0xf]
        %v750 = vpack.c.bf16 %v743, %v742
        %v751 = vpack.c.bf16 %v745, %v744
        %752 = vset.pattern.permute.xlu0 2
        %753 = vperm.xlu0 %752, %v346
        %v754 = vpop.permute.xlu0 %753
        %756 = vset.pattern.permute.xlu0 2
        %757 = vperm.xlu0 %756, %v347
        %v758 = vpop.permute.xlu0 %757
        %760 = vset.pattern.permute.xlu0 2
        %761 = vperm.xlu0 %760, %v348
        %v762 = vpop.permute.xlu0 %761
        %764 = vset.pattern.permute.xlu0 2
        %765 = vperm.xlu0 %764, %v349
        %v766 = vpop.permute.xlu0 %765
        %v772 = vunpack.c.l.b16 %v746
        %v773 = vunpack.c.l.b16 %v747
        %v774 = vunpack.c.l.b16 %v748
        %v775 = vunpack.c.l.b16 %v749
        %v776 = vpack.c.b16 %v773, %v772
        %v777 = vpack.c.b16 %v775, %v774
        %v779 = vsel %vm654, %v776, 0
        %v782 = vsel %vm654, %v777, 0
        %784 = vmatprep.subr.bf16.mxu0 0
        %785 = vmatpush1.bf16.msra.mxu0 %v750
        %786 = vmatprep.subr.bf16.mxu0 0
        %787 = vmatpush1.bf16.msra.mxu0 %v751
        %788 = vmatprep.subr.bf16.mxu0 0
        %789 = vmatpush1.bf16.msra.mxu0 0
        %790 = vmatprep.subr.bf16.mxu0 0
        %791 = vmatpush1.bf16.msra.mxu0 0
        %792 = vmatprep.subr.bf16.mxu0 0
        %793 = vmatpush1.bf16.msra.mxu0 0
        %794 = vmatprep.subr.bf16.mxu0 0
        %795 = vmatpush1.bf16.msra.mxu0 0
        %796 = vmatprep.subr.bf16.mxu0 0
        %797 = vmatpush1.bf16.msra.mxu0 0
        %798 = vmatprep.subr.bf16.mxu0 0
        %799 = vmatpush1.bf16.msra.mxu0 0
        %800 = vmatprep.subr.bf16.mxu0 0
        %801 = vmatpush1.bf16.msra.mxu0 0
        %802 = vmatprep.subr.bf16.mxu0 0
        %803 = vmatpush1.bf16.msra.mxu0 0
        %804 = vmatprep.subr.bf16.mxu0 0
        %805 = vmatpush1.bf16.msra.mxu0 0
        %806 = vmatprep.subr.bf16.mxu0 0
        %807 = vmatpush1.bf16.msra.mxu0 0
        %808 = vmatprep.subr.bf16.mxu0 0
        %809 = vmatpush1.bf16.msra.mxu0 0
        %810 = vmatprep.subr.bf16.mxu0 0
        %811 = vmatpush1.bf16.msra.mxu0 0
        %812 = vmatprep.subr.bf16.mxu0 0
        %813 = vmatpush1.bf16.msra.mxu0 0
        %814 = vmatprep.subr.bf16.mxu0 0
        %815 = vmatpush1.bf16.msra.mxu0 0
        %816 = vmatprep.mubr.bf16.mxu0 0
        %817 = vmatmul.mubr.bf16.gmra.mrb[0].mxu0 %v779
        %v818 = vpop.f32.mrb[0].mxu0
        %v819 = vadd.f32 %v754, %v818
        %v820 = vpop.f32.mrb[0].mxu0
        %v821 = vpop.f32.mrb[0].mxu0
        %v822 = vadd.f32 %v758, %v821
        %v823 = vpop.f32.mrb[0].mxu0
        %824 = vmatprep.mubr.bf16.mxu0 0
        %825 = vmatmul.mubr.bf16.gmra.mrb[0].mxu0 %v782
        %v826 = vpop.f32.mrb[0].mxu0
        %v827 = vadd.f32 %v762, %v826
        %v828 = vpop.f32.mrb[0].mxu0
        %v829 = vpop.f32.mrb[0].mxu0
        %v830 = vadd.f32 %v766, %v829
        %v831 = vpop.f32.mrb[0].mxu0
        %832 = vdwg.mxu0
        %v833 = vmul.f32 %v819, %v819
        %v834 = vmul.f32 %v822, %v822
        %v835 = vmul.f32 %v827, %v827
        %v836 = vmul.f32 %v830, %v830
        %v837 = vmul.f32 %v819, %v833
        %v838 = vmul.f32 %v822, %v834
        %v839 = vmul.f32 %v827, %v835
        %v840 = vmul.f32 %v830, %v836
        %v841 = vmul.f32 %v837, 0.044715
        %v842 = vmul.f32 %v838, 0.044715
        %v843 = vmul.f32 %v839, 0.044715
        %v844 = vmul.f32 %v840, 0.044715
        %v845 = vadd.f32 %v819, %v841
        %v846 = vadd.f32 %v822, %v842
        %v847 = vadd.f32 %v827, %v843
        %v848 = vadd.f32 %v830, %v844
        %v849 = vmul.f32 %v845, 0.7978846
        %v850 = vmul.f32 %v846, 0.7978846
        %v851 = vmul.f32 %v847, 0.7978846
        %v852 = vmul.f32 %v848, 0.7978846
        %v853 = vtanh.pop %v849
        %v854 = vtanh.pop %v850
        %v855 = vtanh.pop %v851
        %v856 = vtanh.pop %v852
        %v857 = vadd.f32 %v853, 1.0
        %v858 = vadd.f32 %v854, 1.0
        %v859 = vadd.f32 %v855, 1.0
        %v860 = vadd.f32 %v856, 1.0
        %v861 = vmul.f32 %v857, 0.5
        %v862 = vmul.f32 %v858, 0.5
        %v863 = vmul.f32 %v859, 0.5
        %v864 = vmul.f32 %v860, 0.5
        %v865 = vmul.f32 %v819, %v861
        %v866 = vmul.f32 %v822, %v862
        %v867 = vmul.f32 %v827, %v863
        %v868 = vmul.f32 %v830, %v864
        %v869 = vld [vmem:[%s6] sm:$0xf]
        %v870 = vld [vmem:[%s6 + $0x4] sm:$0xf]
        %v871 = vld [vmem:[%s6 + $0x8] sm:$0xf]
        %v872 = vld [vmem:[%s6 + $0xc] sm:$0xf]
        %v873 = vpack.c.bf16 %v866, %v865
        %v874 = vpack.c.bf16 %v868, %v867
        %875 = vset.pattern.permute.xlu0 3
        %876 = vperm.xlu0 %875, %v346
        %v877 = vpop.permute.xlu0 %876
        %879 = vset.pattern.permute.xlu0 3
        %880 = vperm.xlu0 %879, %v347
        %v881 = vpop.permute.xlu0 %880
        %883 = vset.pattern.permute.xlu0 3
        %884 = vperm.xlu0 %883, %v348
        %v885 = vpop.permute.xlu0 %884
        %887 = vset.pattern.permute.xlu0 3
        %888 = vperm.xlu0 %887, %v349
        %v889 = vpop.permute.xlu0 %888
        %v895 = vunpack.c.l.b16 %v869
        %v896 = vunpack.c.l.b16 %v870
        %v897 = vunpack.c.l.b16 %v871
        %v898 = vunpack.c.l.b16 %v872
        %v899 = vpack.c.b16 %v896, %v895
        %v900 = vpack.c.b16 %v898, %v897
        %v902 = vsel %vm654, %v899, 0
        %v905 = vsel %vm654, %v900, 0
        %907 = vmatprep.subr.bf16.mxu0 0
        %908 = vmatpush1.bf16.msra.mxu0 %v873
        %909 = vmatprep.subr.bf16.mxu0 0
        %910 = vmatpush1.bf16.msra.mxu0 %v874
        %911 = vmatprep.subr.bf16.mxu0 0
        %912 = vmatpush1.bf16.msra.mxu0 0
        %913 = vmatprep.subr.bf16.mxu0 0
        %914 = vmatpush1.bf16.msra.mxu0 0
        %915 = vmatprep.subr.bf16.mxu0 0
        %916 = vmatpush1.bf16.msra.mxu0 0
        %917 = vmatprep.subr.bf16.mxu0 0
        %918 = vmatpush1.bf16.msra.mxu0 0
        %919 = vmatprep.subr.bf16.mxu0 0
        %920 = vmatpush1.bf16.msra.mxu0 0
        %921 = vmatprep.subr.bf16.mxu0 0
        %922 = vmatpush1.bf16.msra.mxu0 0
        %923 = vmatprep.subr.bf16.mxu0 0
        %924 = vmatpush1.bf16.msra.mxu0 0
        %925 = vmatprep.subr.bf16.mxu0 0
        %926 = vmatpush1.bf16.msra.mxu0 0
        %927 = vmatprep.subr.bf16.mxu0 0
        %928 = vmatpush1.bf16.msra.mxu0 0
        %929 = vmatprep.subr.bf16.mxu0 0
        %930 = vmatpush1.bf16.msra.mxu0 0
        %931 = vmatprep.subr.bf16.mxu0 0
        %932 = vmatpush1.bf16.msra.mxu0 0
        %933 = vmatprep.subr.bf16.mxu0 0
        %934 = vmatpush1.bf16.msra.mxu0 0
        %935 = vmatprep.subr.bf16.mxu0 0
        %936 = vmatpush1.bf16.msra.mxu0 0
        %937 = vmatprep.subr.bf16.mxu0 0
        %938 = vmatpush1.bf16.msra.mxu0 0
        %939 = vmatprep.mubr.bf16.mxu0 0
        %940 = vmatmul.mubr.bf16.gmra.mrb[0].mxu0 %v902
        %v941 = vpop.f32.mrb[0].mxu0
        %v942 = vadd.f32 %v877, %v941
        %v943 = vpop.f32.mrb[0].mxu0
        %v944 = vpop.f32.mrb[0].mxu0
        %v945 = vadd.f32 %v881, %v944
        %v946 = vpop.f32.mrb[0].mxu0
        %947 = vmatprep.mubr.bf16.mxu0 0
        %948 = vmatmul.mubr.bf16.gmra.mrb[0].mxu0 %v905
        %v949 = vpop.f32.mrb[0].mxu0
        %v950 = vadd.f32 %v885, %v949
        %v951 = vpop.f32.mrb[0].mxu0
        %v952 = vpop.f32.mrb[0].mxu0
        %v953 = vadd.f32 %v889, %v952
        %v954 = vpop.f32.mrb[0].mxu0
        %955 = vdwg.mxu0
        %v956 = vmul.f32 %v942, %v942
        %v957 = vmul.f32 %v945, %v945
        %v958 = vmul.f32 %v950, %v950
        %v959 = vmul.f32 %v953, %v953
        %v960 = vmul.f32 %v942, %v956
        %v961 = vmul.f32 %v945, %v957
        %v962 = vmul.f32 %v950, %v958
        %v963 = vmul.f32 %v953, %v959
        %v964 = vmul.f32 %v960, 0.044715
        %v965 = vmul.f32 %v961, 0.044715
        %v966 = vmul.f32 %v962, 0.044715
        %v967 = vmul.f32 %v963, 0.044715
        %v968 = vadd.f32 %v942, %v964
        %v969 = vadd.f32 %v945, %v965
        %v970 = vadd.f32 %v950, %v966
        %v971 = vadd.f32 %v953, %v967
        %v972 = vmul.f32 %v968, 0.7978846
        %v973 = vmul.f32 %v969, 0.7978846
        %v974 = vmul.f32 %v970, 0.7978846
        %v975 = vmul.f32 %v971, 0.7978846
        %v976 = vtanh.pop %v972
        %v977 = vtanh.pop %v973
        %v978 = vtanh.pop %v974
        %v979 = vtanh.pop %v975
        %v980 = vadd.f32 %v976, 1.0
        %v981 = vadd.f32 %v977, 1.0
        %v982 = vadd.f32 %v978, 1.0
        %v983 = vadd.f32 %v979, 1.0
        %v984 = vmul.f32 %v980, 0.5
        %v985 = vmul.f32 %v981, 0.5
        %v986 = vmul.f32 %v982, 0.5
        %v987 = vmul.f32 %v983, 0.5
        %v988 = vmul.f32 %v942, %v984
        %v989 = vmul.f32 %v945, %v985
        %v990 = vmul.f32 %v950, %v986
        %v991 = vmul.f32 %v953, %v987
        %v992 = vadd.f32 %v742, %v988
        %v993 = vadd.f32 %v743, %v989
        %v994 = vadd.f32 %v744, %v990
        %v995 = vadd.f32 %v745, %v991
        %996 = vst [vmem:[%s331] sm:$0xff] %v992
        %997 = vst [vmem:[%s331 + $0x8] sm:$0xff] %v993
        %998 = vst [vmem:[%s331 + $0x10] sm:$0xff] %v994
        %999 = vst [vmem:[%s331 + $0x18] sm:$0xff] %v995
        %s1000 = sand.u32 %s224, 1
        %s1001 = scalar_lea.sflag [#allocation3], %s1000
        %s1002 = sand.u32 %s224, 1
        %s1003 = smul.addr %s1002, 32
        %s1004 = scalar_lea.vmem [#allocation2], %s1003
        // Predicated region
        $region53: #{tpu_custom_call.1} parent=51 // pred_check
          %p1005 = pneg %p234
        $region54: #{tpu_custom_call.1} parent=51 // pred_check_branch
          %1007 = sbr.rel (%p1005) target = $region56
        $region55: #{tpu_custom_call.1} parent=51 // pred_region
          %s1009 = ssub.s32 512, 512
          %1010 = vsyncadd %s1001, %s1009
          %s1011 = smul.addr %s27, 4
          %s1012 = sadd.s32 %s26, %s1011
          %s1013 = smul.addr %s1012, 128
          %s1014 = scalar_lea.hbm %s8, %s1013
          %s1015 = sshll.u32 %s1004, 4
          %s1016 = int_to_ptr.vmem [resolvable:$true] %s1015
          %1021 = dma.vmem_to_hbm [thread:$0]  %s1016, 512, %s1014, %s1001, 128, 128, 8
        $region56: #{tpu_custom_call.1} parent=51 // pred_fallthru
          _
      $region52: #{tpu_custom_call.1} parent=5 // pred_fallthru
        _
      %p1022 = scmp.le.s32.totalorder 2, %s17
      // Predicated region
      $region57: #{tpu_custom_call.1} parent=5 // pred_check
        %p1023 = pneg %p1022
      $region58: #{tpu_custom_call.1} parent=5 // pred_check_branch
        %1025 = sbr.rel (%p1023) target = $region60
      $region59: #{tpu_custom_call.1} parent=5 // pred_region
        %s1026 = ssub.s32 %s17, 2
        // Predicated region
        $region61: #{tpu_custom_call.1} parent=59 // pred_check
          %p1027 = pneg %p240
        $region62: #{tpu_custom_call.1} parent=59 // pred_check_branch
          %1029 = sbr.rel (%p1027) target = $region64
        $region63: #{tpu_custom_call.1} parent=59 // pred_region
          %s1030 = sand.u32 %s225, 1
          %s1031 = scalar_lea.sflag [#allocation3], %s1030
          %s1032 = sand.u32 %s225, 1
          %s1033 = smul.addr %s1032, 32
          %s1034 = scalar_lea.vmem [#allocation2], %s1033
          %1035 = dma.done %s1031, 512
        $region64: #{tpu_custom_call.1} parent=59 // pred_fallthru
          _
      $region60: #{tpu_custom_call.1} parent=5 // pred_fallthru
        _
    $region6: #{tpu_custom_call.1} parent=1 // loop_footer
      %s21 = sadd.s32 1, %s17
    $region7: #{tpu_custom_call.1} parent=1 // loop_footer_branch
      %16 = sbr.rel target = $region3
    $region8: #{tpu_custom_call.1} parent=1 // loop_exit
      _
    %1036 = vsyncpa [#allocation3], 1
    %s1037 = scalar_lea.sflag [#allocation3], 1
    %1038 = vsyncpa %s1037, 1

</llo_original>
